<compile_context>
chip_gen: v7x
topology: tpu7x:2x2x1
jax: 0.10.0
libtpu: 0.0.40
codegen_flags: <defaults>
</compile_context>

<pallas_src>
import functools
import math

import jax
import jax.numpy as jnp
from jax import lax
from jax.experimental import pallas as pl
from jax.experimental.pallas import tpu as pltpu

_LANE = 128
_TARGET_TILE_BYTES = 2 * 1024 * 1024  # ~2 MiB per buffer; double-buffered total ~12 MiB


def make_positional_encoding_table(d_model: int, max_len: int) -> jnp.ndarray:
    """Deterministic pe buffer, identical to the PyTorch __init__ (shape (max_len, d_model))."""
    position = jnp.arange(max_len, dtype=jnp.float32)[:, None]
    div_term = jnp.exp(
        jnp.arange(0, d_model, 2, dtype=jnp.float32) * (-math.log(10000.0) / d_model)
    )
    pe = jnp.zeros((max_len, d_model), jnp.float32)
    pe = pe.at[:, 0::2].set(jnp.sin(position * div_term))
    pe = pe.at[:, 1::2].set(jnp.cos(position * div_term))
    return pe


def _choose_row_tile(rows: int, lane: int, itemsize: int) -> int:
    """Largest multiple-of-8 divisor of `rows` whose tile is <= ~2 MiB; else the full `rows`."""
    target_rows = max(8, _TARGET_TILE_BYTES // (lane * itemsize))
    best = None
    r = 8
    limit = min(rows, target_rows)
    while r <= limit:
        if rows % r == 0:
            best = r
        r += 8
    return best if best is not None else rows


def _pos_enc_kernel(seed_ref, x_ref, pe_ref, o_ref, *, dropout_p, training,
                    row_tile, rows_total, lane):
    # x_ref: (1, row_tile, lane) tile of one batch element; pe_ref: (row_tile, lane),
    # reused (VMEM-resident) across the inner batch grid steps.
    if training and dropout_p >= 1.0:
        # torch.nn.Dropout(p=1.0) zeroes everything.
        o_ref[0] = jnp.zeros_like(o_ref[0])
        return

    y = x_ref[0] + pe_ref[...]  # native-dtype add (pe pre-cast in the wrapper)

    if training and dropout_p > 0.0:
        keep_prob = 1.0 - dropout_p
        c = pl.program_id(0)  # row-tile index (slow axis)
        b = pl.program_id(1)  # batch index (fast axis)
        # Unique global flat element index -> unique dropout bits per element / tile / batch.
        base = b * (rows_total * lane) + c * (row_tile * lane)          # scalar
        row = lax.broadcasted_iota(jnp.int32, (row_tile, lane), 0)
        col = lax.broadcasted_iota(jnp.int32, (row_tile, lane), 1)
        idx = (base + row * lane + col).astype(jnp.uint32)
        # Scalar seed pre-mix (free on the scalar unit), then a 2-multiply lowbias32-style
        # finalizer on the VPU: ~9 vector integer ops per element.
        s = seed_ref[0].astype(jnp.uint32) * jnp.uint32(0x9E3779B9)     # scalar
        h = idx ^ s
        h = h ^ (h >> 16)
        h = h * jnp.uint32(0x21F0AAAD)
        h = h ^ (h >> 15)
        h = h * jnp.uint32(0xD35A2D97)
        h = h ^ (h >> 15)
        # Integer-threshold keep mask: P(keep) = keep_prob (to within 2^-32).
        thresh = jnp.uint32(min(int(round(keep_prob * float(1 << 32))), (1 << 32) - 1))
        keep = h < thresh
        # Inverted dropout, matches torch.nn.Dropout training semantics.
        # Python-float scale is weakly typed -> stays in y's dtype (no fp32 promotion).
        y = jnp.where(keep, y * (1.0 / keep_prob), 0.0)

    o_ref[0] = y.astype(o_ref.dtype)


def positional_encoding(x, pe, seed: int, *, dropout_p: float = 0.1, training: bool = True):
    """x: (N, S, E). pe: (max_len, E) table. Returns dropout(x + pe[None, :S, :])."""
    N, S, E = x.shape
    assert pe.shape[0] >= S and pe.shape[1] == E
    pe_s = pe[:S].astype(x.dtype)  # matches self.pe[:, :x.size(1)]

    L = S * E
    if L % _LANE == 0:
        # Lane-dense layout: each (S, E) slab becomes (rows, 128) so stores are unmasked vst.
        lane = _LANE
        rows = L // _LANE
    else:
        # Fallback: keep (S, E); last block dim equals the full array dim, so any E is legal.
        # TODO(synk): pad E to a multiple of 128 in the wrapper for lane-dense stores in this case.
        lane = E
        rows = S
    x_r = x.reshape(N, rows, lane)
    pe_r = pe_s.reshape(rows, lane)

    row_tile = _choose_row_tile(rows, lane, x.dtype.itemsize)
    num_tiles = rows // row_tile  # row_tile divides rows (or equals rows)

    kernel = functools.partial(
        _pos_enc_kernel, dropout_p=float(dropout_p), training=bool(training),
        row_tile=row_tile, rows_total=rows, lane=lane)

    grid_spec = pltpu.PrefetchScalarGridSpec(
        num_scalar_prefetch=1,            # seed lands in SMEM
        grid=(num_tiles, N),              # batch innermost: pe tile is reused without re-DMA
        in_specs=[
            pl.BlockSpec((1, row_tile, lane), lambda c, b, seed: (b, c, 0)),  # x
            pl.BlockSpec((row_tile, lane), lambda c, b, seed: (c, 0)),        # pe (batch-invariant)
        ],
        out_specs=pl.BlockSpec((1, row_tile, lane), lambda c, b, seed: (b, c, 0)),
    )

    out = pl.pallas_call(
        kernel,
        out_shape=jax.ShapeDtypeStruct((N, rows, lane), x.dtype),
        grid_spec=grid_spec,
        compiler_params=pltpu.CompilerParams(
            dimension_semantics=("parallel", "parallel")),
    )(jnp.asarray([seed], jnp.int32), x_r, pe_r)
    return out.reshape(N, S, E)


if __name__ == "__main__":
    # Small shapes consistent with the (N, S, E) forward contract.
    N, S, E = 2, 8, 32
    MAX_LEN = 64
    DROPOUT_P = 0.1

    key = jax.random.PRNGKey(0)
    x = jax.random.normal(key, (N, S, E), dtype=jnp.float32)

    pe = make_positional_encoding_table(d_model=E, max_len=MAX_LEN)

    # Training-mode forward (dropout active, deterministic stateless PRNG).
    out_train = positional_encoding(x, pe, seed=1234, dropout_p=DROPOUT_P, training=True)
    out_train = jax.block_until_ready(out_train)

    # Eval-mode forward (dropout is identity) — verify exact add semantics.
    out_eval = positional_encoding(x, pe, seed=0, dropout_p=DROPOUT_P, training=False)
    out_eval = jax.block_until_ready(out_eval)
    ref = x + pe[None, :S, :]
    assert out_eval.shape == (N, S, E)
    assert jnp.allclose(out_eval, ref, atol=1e-6, rtol=1e-6), "eval-mode mismatch"

    # Sanity on training output: every element is either dropped (0) or exactly scaled.
    scaled = ref / (1.0 - DROPOUT_P)
    is_zero = jnp.isclose(out_train, 0.0)
    is_scaled = jnp.isclose(out_train, scaled, atol=1e-5, rtol=1e-5)
    assert bool(jnp.all(is_zero | is_scaled)), "training-mode dropout mismatch"

    print("KERNEL_OK")
</pallas_src>

<mosaic_0001>
module attributes {stable_mosaic.version = 11 : i64} {
  func.func @_pos_enc_kernel(%arg0: i32, %arg1: i32, %arg2: memref<1xi32, #tpu.memory_space<smem>>, %arg3: memref<1x2x128xf32, #tpu.memory_space<vmem>>, %arg4: memref<2x128xf32, #tpu.memory_space<vmem>>, %arg5: memref<1x2x128xf32, #tpu.memory_space<vmem>>) attributes {dimension_semantics = [#tpu.dimension_semantics<parallel>, #tpu.dimension_semantics<parallel>], iteration_bounds = array<i64: 1, 2>, scalar_prefetch = 1 : i64, scratch_operands = 0 : i64, tpu.core_type = #tpu.core_type<tc>, window_params = [{transform_indices = @transform_0, window_bounds = array<i64: 1, 2, 128>}, {transform_indices = @transform_1, window_bounds = array<i64: 2, 128>}, {transform_indices = @transform_2, window_bounds = array<i64: 1, 2, 128>}]} {
    %c0 = arith.constant 0 : index
    %c0_0 = arith.constant 0 : index
    %c0_1 = arith.constant 0 : index
    %0 = vector.load %arg3[%c0, %c0_0, %c0_1] : memref<1x2x128xf32, #tpu.memory_space<vmem>>, vector<1x2x128xf32>
    %1 = vector.shape_cast %0 : vector<1x2x128xf32> to vector<2x128xf32>
    %c0_2 = arith.constant 0 : index
    %c0_3 = arith.constant 0 : index
    %2 = vector.load %arg4[%c0_2, %c0_3] : memref<2x128xf32, #tpu.memory_space<vmem>>, vector<2x128xf32>
    %3 = arith.addf %1, %2 : vector<2x128xf32>
    %c256_i32 = arith.constant 256 : i32
    %4 = arith.muli %arg1, %c256_i32 : i32
    %c256_i32_4 = arith.constant 256 : i32
    %5 = arith.muli %arg0, %c256_i32_4 : i32
    %6 = arith.addi %4, %5 : i32
    %7 = tpu.iota {dimensions = array<i32: 0>} : vector<2x128xi32>
    %8 = tpu.iota {dimensions = array<i32: 1>} : vector<2x128xi32>
    %c128_i32 = arith.constant 128 : i32
    %9 = vector.broadcast %c128_i32 : i32 to vector<2x128xi32>
    %10 = arith.muli %7, %9 : vector<2x128xi32>
    %11 = vector.broadcast %6 : i32 to vector<2x128xi32>
    %12 = arith.addi %11, %10 : vector<2x128xi32>
    %13 = arith.addi %12, %8 : vector<2x128xi32>
    %c0_5 = arith.constant 0 : index
    %14 = memref.load %arg2[%c0_5] : memref<1xi32, #tpu.memory_space<smem>>
    %c-1640531527_i32 = arith.constant -1640531527 : i32
    %15 = arith.muli %14, %c-1640531527_i32 : i32
    %16 = vector.broadcast %15 : i32 to vector<2x128xi32>
    %17 = arith.xori %13, %16 : vector<2x128xi32>
    %c16_i32 = arith.constant 16 : i32
    %18 = vector.broadcast %c16_i32 : i32 to vector<2x128xi32>
    %19 = arith.shrui %17, %18 : vector<2x128xi32>
    %20 = arith.xori %17, %19 : vector<2x128xi32>
    %c569420461_i32 = arith.constant 569420461 : i32
    %21 = vector.broadcast %c569420461_i32 : i32 to vector<2x128xi32>
    %22 = arith.muli %20, %21 : vector<2x128xi32>
    %c15_i32 = arith.constant 15 : i32
    %23 = vector.broadcast %c15_i32 : i32 to vector<2x128xi32>
    %24 = arith.shrui %22, %23 : vector<2x128xi32>
    %25 = arith.xori %22, %24 : vector<2x128xi32>
    %c-749064809_i32 = arith.constant -749064809 : i32
    %26 = vector.broadcast %c-749064809_i32 : i32 to vector<2x128xi32>
    %27 = arith.muli %25, %26 : vector<2x128xi32>
    %c15_i32_6 = arith.constant 15 : i32
    %28 = vector.broadcast %c15_i32_6 : i32 to vector<2x128xi32>
    %29 = arith.shrui %27, %28 : vector<2x128xi32>
    %30 = arith.xori %27, %29 : vector<2x128xi32>
    %c-429496730_i32 = arith.constant -429496730 : i32
    %31 = vector.broadcast %c-429496730_i32 : i32 to vector<2x128xi32>
    %32 = arith.cmpi ult, %30, %31 : vector<2x128xi32>
    %cst = arith.constant 1.11111116 : f32
    %33 = vector.broadcast %cst : f32 to vector<2x128xf32>
    %34 = arith.mulf %3, %33 : vector<2x128xf32>
    %cst_7 = arith.constant 0.000000e+00 : f32
    %35 = vector.broadcast %cst_7 : f32 to vector<2x128xf32>
    %36 = arith.select %32, %34, %35 : vector<2x128xi1>, vector<2x128xf32>
    %c0_8 = arith.constant 0 : index
    %c0_9 = arith.constant 0 : index
    %c0_10 = arith.constant 0 : index
    %37 = vector.load %arg5[%c0_8, %c0_9, %c0_10] : memref<1x2x128xf32, #tpu.memory_space<vmem>>, vector<1x2x128xf32>
    %38 = vector.shape_cast %37 : vector<1x2x128xf32> to vector<2x128xf32>
    %39 = vector.shape_cast %36 : vector<2x128xf32> to vector<1x2x128xf32>
    tpu.vector_store %arg5[%c0_8, %c0_9, %c0_10], %39 {strides = array<i32>} : memref<1x2x128xf32, #tpu.memory_space<vmem>>, vector<1x2x128xf32>,
    return
  }
  func.func @transform_0(%arg0: i32, %arg1: i32, %arg2: memref<1xi32, #tpu.memory_space<smem>>) -> (i32, i32, i32) {
    %c0_i32 = arith.constant 0 : i32
    %c0_i32_0 = arith.constant 0 : i32
    return %arg1, %arg0, %c0_i32 : i32, i32, i32
  }
  func.func @transform_1(%arg0: i32, %arg1: i32, %arg2: memref<1xi32, #tpu.memory_space<smem>>) -> (i32, i32) {
    %c0_i32 = arith.constant 0 : i32
    %c0_i32_0 = arith.constant 0 : i32
    return %arg0, %c0_i32 : i32, i32
  }
  func.func @transform_2(%arg0: i32, %arg1: i32, %arg2: memref<1xi32, #tpu.memory_space<smem>>) -> (i32, i32, i32) {
    %c0_i32 = arith.constant 0 : i32
    %c0_i32_0 = arith.constant 0 : i32
    return %arg1, %arg0, %c0_i32 : i32, i32, i32
  }
}

</mosaic_0001>

<llo_original>
// kernel: tpu_custom_call.1
$region0: #{tpu_custom_call.1}
  #allocation0 [shape = 'u32[]', space=smem, size = 0x4, offset = 0x4, fixed_abs, tag = 'smem constant byte address 0x4 - core index']
  #allocation1 [shape = 'u32[144,128]{1,0:T(1,128)}', space=vmem, size = 0x12000, scoped, tag = 'internal scratch']
  #allocation2 [shape = 's32[1]{0}', space=sflag, size = 0x4, scoped, tag = 'scoped memory for tpu_custom_call.1']
  #allocation3 [shape = 's32[1]{0:T(128)S(6)}', space=smem, size = 0x200, scoped, tag = 'prefetched SMEM operand 0']
  %s0 = inlined_call_operand.<no memory space> [shape: s32[1], index: 0, kind: input, shape index: {}]
  %s1 = inlined_call_operand.hbm [shape: f32[2,2,128], index: 1, kind: input, shape index: {}]
  %s2 = inlined_call_operand.vmem [shape: f32[2,128], index: 2, kind: input, shape index: {}]
  %s3 = inlined_call_operand.hbm [shape: f32[2,2,128], index: 3, kind: output, shape index: {}]
  %s4 = sld [smem:[#allocation0]]
  $region45: #{tpu_custom_call.1} parent=0
    _
  %s6 = ssub.s32 1, %s4
  %s7 = scalar_select 0, %s6, %s4
  %8 = sst [smem:[#allocation3]] %s0
  $region1: #{tpu_custom_call.1} parent=0
    #allocation4 [shape = 'u8[2048]{0}', space=vmem, size = 0x800, scoped, tag = 'input window, operand 1']
    #allocation5 [shape = 's32[2]{0}', space=sflag, size = 0x8, scoped, tag = 'scoped memory for tpu_custom_call.1']
    #allocation6 [shape = 's32[2]{0}', space=sflag, size = 0x8, scoped, tag = 'scoped memory for tpu_custom_call.1']
    #allocation7 [shape = 'u8[2048]{0}', space=vmem, size = 0x800, scoped, tag = 'output window, operand 0']
    %9 = vsyncpa [#allocation5], 0
    %s10 = scalar_lea.sflag [#allocation5], 1
    %11 = vsyncpa %s10, 0
    %12 = vsyncpa [#allocation6], 0
    %s13 = scalar_lea.sflag [#allocation6], 1
    %14 = vsyncpa %s13, 0
    loop: start=0, step=1, limit=4
    $region2: #{tpu_custom_call.1} parent=1 // loop_pre_header
      _
    $region3: #{tpu_custom_call.1} parent=1 // loop_header
      %s16 = sphi 0, %s20
      %p17 = scmp.ge.s32.totalorder %s16, 4
      %s23 = sphi 0, %s35
      %s24 = sphi 0, %s31
      %s25 = sphi 0, %s23
      %s26 = sphi 0, %s24
      %s27 = sphi 0, %s25
      %s28 = sphi 0, %s26
      %s40 = sphi 0, %s42
      %s43 = sphi 0, %s40
      %s44 = sphi 0, %s43
      %s60 = sphi 0, %s44
      %s66 = sphi 0, %s68
      %s69 = sphi 0, %s66
      %s70 = sphi 0, %s69
      %s86 = sphi 0, %s70
      %s94 = sphi 0, %s96
      %s97 = sphi 0, %s94
      %s98 = sphi 0, %s97
      %s114 = sphi 0, %s98
    $region4: #{tpu_custom_call.1} parent=1 // loop_header_branch
      %19 = sbr.rel (%p17) target = $region8
    $region5: #{tpu_custom_call.1} parent=1 // loop_body
      %s21 = ssub.s32 %s16, 1
      %s22 = ssub.s32 %s16, 2
      %s29 = sadd.s32 1, %s24
      %p30 = scmp.ge.s32.totalorder %s29, 2
      %s31 = scalar_select %p30, 0, %s29
      %s32 = sadd.s32 1, %s23
      %s33 = scalar_select %p30, %s32, %s23
      %p34 = scmp.ge.s32.totalorder %s33, 1
      %s35 = scalar_select %p34, 0, %s33
      %s36 = ssub.s32 %s24, %s31
      %s37 = ssub.s32 %s23, %s35
      %s38 = sor.u32 %s36, %s37
      %p39 = scmp.eq.s32.totalorder %s38, 0
      %s41 = sadd.s32 %s40, 1
      %s42 = scalar_select %p39, %s40, %s41
      %p45 = pneg %p39
      %p46 = scmp.eq.s32.totalorder %s16, 1
      %p47 = por %p45, %p46
      %p48 = scmp.ne.s32.totalorder %s40, %s43
      %p49 = scmp.eq.s32.totalorder %s16, 0
      %p50 = por %p48, %p49
      %p51 = scmp.ne.s32.totalorder %s40, %s43
      %p52 = scmp.eq.s32.totalorder %s21, 1
      %p53 = por %p51, %p52
      %p54 = scmp.ne.s32.totalorder %s43, %s44
      %p55 = scmp.eq.s32.totalorder %s21, 0
      %p56 = por %p54, %p55
      %p57 = scmp.ne.s32.totalorder %s43, %s44
      %p58 = scmp.eq.s32.totalorder %s22, 1
      %p59 = por %p57, %p58
      %p61 = scmp.ne.s32.totalorder %s44, %s60
      %p62 = scmp.eq.s32.totalorder %s22, 0
      %p63 = por %p61, %p62
      %s64 = ssub.s32 %s23, %s35
      %p65 = scmp.eq.s32.totalorder %s64, 0
      %s67 = sadd.s32 %s66, 1
      %s68 = scalar_select %p65, %s66, %s67
      %p71 = pneg %p65
      %p72 = scmp.eq.s32.totalorder %s16, 1
      %p73 = por %p71, %p72
      %p74 = scmp.ne.s32.totalorder %s66, %s69
      %p75 = scmp.eq.s32.totalorder %s16, 0
      %p76 = por %p74, %p75
      %p77 = scmp.ne.s32.totalorder %s66, %s69
      %p78 = scmp.eq.s32.totalorder %s21, 1
      %p79 = por %p77, %p78
      %p80 = scmp.ne.s32.totalorder %s69, %s70
      %p81 = scmp.eq.s32.totalorder %s21, 0
      %p82 = por %p80, %p81
      %p83 = scmp.ne.s32.totalorder %s69, %s70
      %p84 = scmp.eq.s32.totalorder %s22, 1
      %p85 = por %p83, %p84
      %p87 = scmp.ne.s32.totalorder %s70, %s86
      %p88 = scmp.eq.s32.totalorder %s22, 0
      %p89 = por %p87, %p88
      %s90 = ssub.s32 %s24, %s31
      %s91 = ssub.s32 %s23, %s35
      %s92 = sor.u32 %s90, %s91
      %p93 = scmp.eq.s32.totalorder %s92, 0
      %s95 = sadd.s32 %s94, 1
      %s96 = scalar_select %p93, %s94, %s95
      %p99 = pneg %p93
      %p100 = scmp.eq.s32.totalorder %s16, 1
      %p101 = por %p99, %p100
      %p102 = scmp.ne.s32.totalorder %s94, %s97
      %p103 = scmp.eq.s32.totalorder %s16, 0
      %p104 = por %p102, %p103
      %p105 = scmp.ne.s32.totalorder %s94, %s97
      %p106 = scmp.eq.s32.totalorder %s21, 1
      %p107 = por %p105, %p106
      %p108 = scmp.ne.s32.totalorder %s97, %s98
      %p109 = scmp.eq.s32.totalorder %s21, 0
      %p110 = por %p108, %p109
      %p111 = scmp.ne.s32.totalorder %s97, %s98
      %p112 = scmp.eq.s32.totalorder %s22, 1
      %p113 = por %p111, %p112
      %p115 = scmp.ne.s32.totalorder %s98, %s114
      %p116 = scmp.eq.s32.totalorder %s22, 0
      %p117 = por %p115, %p116
      %p118 = scmp.le.s32.totalorder 1, %s16
      %p119 = scmp.lt.s32.totalorder %s16, 3
      %p120 = pnand %p118, %p119
      %p121 = pneg %p120
      // Predicated region
      $region9: #{tpu_custom_call.1} parent=5 // pred_check
        _
      $region10: #{tpu_custom_call.1} parent=5 // pred_check_branch
        %123 = sbr.rel (%p120) target = $region12
      $region11: #{tpu_custom_call.1} parent=5 // pred_region
        %s124 = ssub.s32 %s16, 1
        // Predicated region
        $region13: #{tpu_custom_call.1} parent=11 // pred_check
          %p125 = pneg %p82
        $region14: #{tpu_custom_call.1} parent=11 // pred_check_branch
          %127 = sbr.rel (%p125) target = $region16
        $region15: #{tpu_custom_call.1} parent=11 // pred_region
          %p128 = scmp.lt.s32.totalorder %s25, 0
          %s129 = scalar_select %p128, %s25, 0
          %s130 = smul.addr %s129, 2
          %s131 = scalar_lea.vmem %s2, %s130
        $region16: #{tpu_custom_call.1} parent=11 // pred_fallthru
          _
      $region12: #{tpu_custom_call.1} parent=5 // pred_fallthru
        _
      %p132 = scmp.lt.s32.totalorder %s16, 2
      // Predicated region
      $region17: #{tpu_custom_call.1} parent=5 // pred_check
        %p133 = pneg %p132
      $region18: #{tpu_custom_call.1} parent=5 // pred_check_branch
        %135 = sbr.rel (%p133) target = $region20
      $region19: #{tpu_custom_call.1} parent=5 // pred_region
        // Predicated region
        $region21: #{tpu_custom_call.1} parent=19 // pred_check
          %p136 = pneg %p50
        $region22: #{tpu_custom_call.1} parent=19 // pred_check_branch
          %138 = sbr.rel (%p136) target = $region24
        $region23: #{tpu_custom_call.1} parent=19 // pred_region
          %s139 = sand.u32 %s40, 1
          %s140 = scalar_lea.sflag [#allocation5], %s139
          %s141 = sand.u32 %s40, 1
          %s142 = smul.addr %s141, 2
          %s143 = scalar_lea.vmem [#allocation4], %s142
          %s145 = ssub.s32 32, 32
          %146 = vsyncadd %s140, %s145
          %s147 = sadd.s32 %s23, %s24
          %s148 = smul.addr %s147, 32
          %s149 = scalar_lea.hbm %s1, %s148
          %s151 = sshll.u32 %s143, 4
          %s152 = int_to_ptr.vmem [resolvable:$true] %s151
          %154 = dma.hbm_to_vmem [thread:$0]  %s149, 32, %s152, %s140
        $region24: #{tpu_custom_call.1} parent=19 // pred_fallthru
          _
      $region20: #{tpu_custom_call.1} parent=5 // pred_fallthru
        _
      %p155 = scmp.le.s32.totalorder 1, %s16
      %p156 = scmp.lt.s32.totalorder %s16, 3
      %p157 = pnand %p155, %p156
      %p158 = pneg %p157
      // Predicated region
      $region25: #{tpu_custom_call.1} parent=5 // pred_check
        _
      $region26: #{tpu_custom_call.1} parent=5 // pred_check_branch
        %160 = sbr.rel (%p157) target = $region28
      $region27: #{tpu_custom_call.1} parent=5 // pred_region
        %s161 = ssub.s32 %s16, 1
        %s162 = sand.u32 %s43, 1
        %s163 = scalar_lea.sflag [#allocation5], %s162
        %s164 = sand.u32 %s43, 1
        %s165 = smul.addr %s164, 2
        %s166 = scalar_lea.vmem [#allocation4], %s165
        // Predicated region
        $region29: #{tpu_custom_call.1} parent=27 // pred_check
          %p167 = pneg %p56
        $region30: #{tpu_custom_call.1} parent=27 // pred_check_branch
          %169 = sbr.rel (%p167) target = $region32
        $region31: #{tpu_custom_call.1} parent=27 // pred_region
          %170 = dma.done %s163, 32
        $region32: #{tpu_custom_call.1} parent=27 // pred_fallthru
          _
        %s171 = sand.u32 %s43, 1
        %s172 = scalar_lea.sflag [#allocation5], %s171
        %s173 = sand.u32 %s43, 1
        %s174 = smul.addr %s173, 2
        %s175 = scalar_lea.vmem [#allocation4], %s174
        %p176 = pneg %p56
        %p177 = pneg %p53
        %p178 = scmp.lt.s32.totalorder %s25, 0
        %s179 = scalar_select %p178, %s25, 0
        %s180 = smul.addr %s179, 2
        %s181 = scalar_lea.vmem %s2, %s180
        %p182 = pneg %p82
        %p183 = pneg %p79
        %p184 = pneg %p110
        %p185 = pneg %p107
        %s186 = sand.u32 %s97, 1
        %s187 = scalar_lea.sflag [#allocation6], %s186
        %s188 = sand.u32 %s97, 1
        %s189 = smul.addr %s188, 2
        %s190 = scalar_lea.vmem [#allocation7], %s189
        %p191 = scmp.lt.s32.totalorder %s25, 0
        %s192 = scalar_select %p191, %s25, 0
        %s193 = smul.addr %s192, 2
        %s194 = scalar_lea.vmem %s2, %s193
        %v195 = vld [vmem:[%s166] sm:$0x3]
        %v196 = vld [vmem:[%s194] sm:$0x3]
        %v197 = vadd.f32 %v195, %v196
        %s198 = smul.u32 %s26, 256
        %s199 = smul.u32 %s25, 256
        %s200 = sadd.s32 %s198, %s199
        %v201 = vlaneseq
        %v202 = vshrl.u32 %v201, 7
        %v203 = vlaneseq
        %v204 = vand.u32 %v203, 127
        %v205 = vmul.u32 %v202, 128
        %v206 = vstv %s200
        %v207 = vadd.s32 %v206, %v205
        %v208 = vadd.s32 %v207, %v204
        %s209 = sld [smem:[#allocation3]]
        %s210 = smul.u32 %s209, 2654435769
        %v211 = vstv %s210
        %v212 = vxor.u32 %v208, %v211
        %v213 = vshrl.u32 %v212, 16
        %v214 = vxor.u32 %v212, %v213
        %v215 = vmul.u32 %v214, 569420461
        %v216 = vshrl.u32 %v215, 15
        %v217 = vxor.u32 %v215, %v216
        %v218 = vmul.u32 %v217, 3545902487
        %v219 = vshrl.u32 %v218, 15
        %v220 = vxor.u32 %v218, %v219
        %vm221 = vcmp.lt.u32.totalorder %v220, 3865470566
        %v222 = vmul.f32 %v197, 1.1111112
        %v223 = vsel %vm221, %v222, 0.0
        %224 = vst [vmem:[%s190] sm:$0x3] %v223
        %s225 = sand.u32 %s97, 1
        %s226 = scalar_lea.sflag [#allocation6], %s225
        %s227 = sand.u32 %s97, 1
        %s228 = smul.addr %s227, 2
        %s229 = scalar_lea.vmem [#allocation7], %s228
        // Predicated region
        $region33: #{tpu_custom_call.1} parent=27 // pred_check
          %p230 = pneg %p107
        $region34: #{tpu_custom_call.1} parent=27 // pred_check_branch
          %232 = sbr.rel (%p230) target = $region36
        $region35: #{tpu_custom_call.1} parent=27 // pred_region
          %s234 = ssub.s32 32, 32
          %235 = vsyncadd %s226, %s234
          %s236 = sadd.s32 %s25, %s26
          %s237 = smul.addr %s236, 32
          %s238 = scalar_lea.hbm %s3, %s237
          %s240 = sshll.u32 %s229, 4
          %s241 = int_to_ptr.vmem [resolvable:$true] %s240
          %243 = dma.vmem_to_hbm [thread:$0]  %s241, 32, %s238, %s226
        $region36: #{tpu_custom_call.1} parent=27 // pred_fallthru
          _
      $region28: #{tpu_custom_call.1} parent=5 // pred_fallthru
        _
      %p244 = scmp.le.s32.totalorder 2, %s16
      // Predicated region
      $region37: #{tpu_custom_call.1} parent=5 // pred_check
        %p245 = pneg %p244
      $region38: #{tpu_custom_call.1} parent=5 // pred_check_branch
        %247 = sbr.rel (%p245) target = $region40
      $region39: #{tpu_custom_call.1} parent=5 // pred_region
        %s248 = ssub.s32 %s16, 2
        // Predicated region
        $region41: #{tpu_custom_call.1} parent=39 // pred_check
          %p249 = pneg %p113
        $region42: #{tpu_custom_call.1} parent=39 // pred_check_branch
          %251 = sbr.rel (%p249) target = $region44
        $region43: #{tpu_custom_call.1} parent=39 // pred_region
          %s252 = sand.u32 %s98, 1
          %s253 = scalar_lea.sflag [#allocation6], %s252
          %s254 = sand.u32 %s98, 1
          %s255 = smul.addr %s254, 2
          %s256 = scalar_lea.vmem [#allocation7], %s255
          %257 = dma.done %s253, 32
        $region44: #{tpu_custom_call.1} parent=39 // pred_fallthru
          _
      $region40: #{tpu_custom_call.1} parent=5 // pred_fallthru
        _
    $region6: #{tpu_custom_call.1} parent=1 // loop_footer
      %s20 = sadd.s32 1, %s16
    $region7: #{tpu_custom_call.1} parent=1 // loop_footer_branch
      %15 = sbr.rel target = $region3
    $region8: #{tpu_custom_call.1} parent=1 // loop_exit
      _
    %258 = vsyncpa [#allocation5], 1
    %s259 = scalar_lea.sflag [#allocation5], 1
    %260 = vsyncpa %s259, 1
    %261 = vsyncpa [#allocation6], 1
    %s262 = scalar_lea.sflag [#allocation6], 1
    %263 = vsyncpa %s262, 1

</llo_original>
